<compile_context>
chip_gen: v7x
topology: tpu7x:2x2x1
jax: 0.10.0
libtpu: 0.0.40
codegen_flags: <defaults>
</compile_context>

<pallas_src>
import jax
import jax.numpy as jnp
from jax.experimental import pallas as pl
from jax.experimental.pallas import tpu as pltpu

# ---- static problem configuration (small, consistent with the module) ----
LATENT_DIM = 16          # D
NUM_USERS = 12           # U
NUM_ITEMS = 20
N_NODES = NUM_USERS + NUM_ITEMS   # adj is (N, N)
BATCH = 8                # B  (B <= NUM_USERS and NUM_USERS + B <= N_NODES)
HIDDEN = 64              # weight_generator hidden width


def odefunc_kernel(x_ref, e_ref, adj_ref, wpack_ref, bpack_ref, out_ref):
    D, B, H = LATENT_DIM, BATCH, HIDDEN

    x = x_ref[...]                    # (B, 2D)   input state
    e = e_ref[...]                    # (2B, D)   rows = [E_u; E_i]

    # Graph effect for both halves with a single MXU push/pop:
    #   [[A_uu A_ui],[A_iu A_ii]] @ [E_u; E_i] = [ge_u; ge_i]
    ge = jnp.dot(adj_ref[...], e, preferred_element_type=jnp.float32)   # (2B, D)
    effect = ge - e                   # (2B, D)   rows = [effect_u; effect_i]

    # weights = Sigmoid(Linear(ReLU(Linear(x))))  -- MXU + VPU/EUP
    w1 = wpack_ref[0:2 * D, :]               # (2D, H)
    w2 = wpack_ref[2 * D:2 * D + H, 0:D]     # (H, D)   lane-aligned slice
    b1 = bpack_ref[0:1, :]                   # (1, H)
    b2 = bpack_ref[1:2, 0:D]                 # (1, D)
    h = jnp.maximum(jnp.dot(x, w1, preferred_element_type=jnp.float32) + b1, 0.0)
    w = jax.nn.sigmoid(jnp.dot(h, w2, preferred_element_type=jnp.float32) + b2)  # (B, D)

    # out = cat([w * effect_u, w * effect_i], dim=1)
    # Sublane slices of `effect` at offsets 0 / B (B==8, tile-aligned) + one
    # full-tile store instead of two masked half-stores.
    out_ref[...] = jnp.concatenate(
        [w * effect[0:B, :], w * effect[B:2 * B, :]], axis=1)


def ode_func_forward(x, adj, w1, b1, w2, b2):
    B, twoD = x.shape
    D, U, H = LATENT_DIM, NUM_USERS, HIDDEN

    # Preconditions the trace-time block decomposition relies on.
    assert twoD == 2 * D, "x must have 2*LATENT_DIM features"
    assert B <= U and U + B <= N_NODES, "batch exceeds adjacency row blocks"
    assert adj.shape == (N_NODES, N_NODES)
    assert w1.shape == (twoD, H) and w2.shape == (H, D)

    # ---- trace-time operand packing (plain XLA, outside the kernel) ----
    # Row-stacked embeddings so the kernel never lane-slices x.
    e = jnp.concatenate([x[:, :D], x[:, D:]], axis=0)                    # (2B, D)

    # Packed 2x2 block adjacency: only the rows/cols that touch the nonzero
    # rows of full_embeddings matter.
    rows = jnp.concatenate([adj[0:B, :], adj[U:U + B, :]], axis=0)       # (2B, N)
    adj_packed = jnp.concatenate([rows[:, 0:B], rows[:, U:U + B]], axis=1)  # (2B,2B)

    # Packed MLP weights: rows [0,2D) = w1, rows [2D,2D+H) = w2 (zero-padded
    # to H lanes so the in-kernel slice starts at lane 0).
    w2_pad = jnp.zeros((H, H), jnp.float32).at[:, 0:D].set(w2)
    wpack = jnp.concatenate([w1, w2_pad], axis=0)                        # (2D+H, H)

    # Packed biases: row 0 = b1, row 1 = b2 zero-padded to H lanes.
    b2_pad = jnp.zeros((1, H), jnp.float32).at[:, 0:D].set(b2)
    bpack = jnp.concatenate([b1, b2_pad], axis=0)                        # (2, H)

    vmem = pl.BlockSpec(memory_space=pltpu.MemorySpace.VMEM)

    flops = 2 * (4 * B * B * D + B * twoD * H + B * H * D)
    bytes_accessed = 4 * (B * twoD            # x
                          + 2 * B * D         # e
                          + 4 * B * B         # adj_packed
                          + (twoD + H) * H    # wpack
                          + 2 * H             # bpack
                          + B * twoD)         # out
    transcendentals = B * D                   # sigmoid

    return pl.pallas_call(
        odefunc_kernel,
        out_shape=jax.ShapeDtypeStruct((B, twoD), jnp.float32),
        in_specs=[vmem] * 5,
        out_specs=vmem,
        cost_estimate=pl.CostEstimate(flops=flops,
                                      transcendentals=transcendentals,
                                      bytes_accessed=bytes_accessed),
    )(x, e, adj_packed, wpack, bpack)


def reference_forward(x, adj, w1, b1, w2, b2):
    """Pure-JAX replica of the PyTorch forward for verification."""
    D, U, B = LATENT_DIM, NUM_USERS, x.shape[0]
    E_u, E_i = x[:, :D], x[:, D:]
    full = jnp.zeros((N_NODES, D), jnp.float32)
    full = full.at[0:B].set(E_u).at[U:U + B].set(E_i)
    ge = adj @ full
    effect_u = ge[0:B] - E_u
    effect_i = ge[U:U + B] - E_i
    h = jnp.maximum(x @ w1 + b1, 0.0)
    w = jax.nn.sigmoid(h @ w2 + b2)
    return jnp.concatenate([w * effect_u, w * effect_i], axis=1)


if __name__ == "__main__":
    key = jax.random.PRNGKey(0)
    kx, kadj, kmask, kw1, kb1, kw2, kb2 = jax.random.split(key, 7)

    # input state x = cat([E_u, E_i], dim=1)
    x = jax.random.normal(kx, (BATCH, 2 * LATENT_DIM), dtype=jnp.float32)

    # deterministic synthetic adjacency (sparse in spirit, stored dense here)
    vals = jax.random.uniform(kadj, (N_NODES, N_NODES), dtype=jnp.float32)
    mask = (jax.random.uniform(kmask, (N_NODES, N_NODES)) < 0.2).astype(jnp.float32)
    adj = vals * mask

    # deterministic weight_generator parameters
    w1 = 0.1 * jax.random.normal(kw1, (2 * LATENT_DIM, HIDDEN), dtype=jnp.float32)
    b1 = 0.1 * jax.random.normal(kb1, (1, HIDDEN), dtype=jnp.float32)
    w2 = 0.1 * jax.random.normal(kw2, (HIDDEN, LATENT_DIM), dtype=jnp.float32)
    b2 = 0.1 * jax.random.normal(kb2, (1, LATENT_DIM), dtype=jnp.float32)

    out = ode_func_forward(x, adj, w1, b1, w2, b2)
    out = jax.block_until_ready(out)

    ref = reference_forward(x, adj, w1, b1, w2, b2)
    assert out.shape == (BATCH, 2 * LATENT_DIM)
    assert jnp.allclose(out, ref, atol=1e-5, rtol=1e-5)

    print("KERNEL_OK")
</pallas_src>

<mosaic_0001>
module attributes {stable_mosaic.version = 11 : i64} {
  func.func @odefunc_kernel(%arg0: memref<8x32xf32, #tpu.memory_space<vmem>>, %arg1: memref<16x16xf32, #tpu.memory_space<vmem>>, %arg2: memref<16x16xf32, #tpu.memory_space<vmem>>, %arg3: memref<96x64xf32, #tpu.memory_space<vmem>>, %arg4: memref<2x64xf32, #tpu.memory_space<vmem>>, %arg5: memref<8x32xf32, #tpu.memory_space<vmem>>) attributes {dimension_semantics = [], scalar_prefetch = 0 : i64, scratch_operands = 0 : i64, tpu.core_type = #tpu.core_type<tc>} {
    %c0 = arith.constant 0 : index
    %c0_0 = arith.constant 0 : index
    %0 = vector.load %arg0[%c0, %c0_0] : memref<8x32xf32, #tpu.memory_space<vmem>>, vector<8x32xf32>
    %c0_1 = arith.constant 0 : index
    %c0_2 = arith.constant 0 : index
    %1 = vector.load %arg1[%c0_1, %c0_2] : memref<16x16xf32, #tpu.memory_space<vmem>>, vector<16x16xf32>
    %c0_3 = arith.constant 0 : index
    %c0_4 = arith.constant 0 : index
    %2 = vector.load %arg2[%c0_3, %c0_4] : memref<16x16xf32, #tpu.memory_space<vmem>>, vector<16x16xf32>
    %cst = arith.constant dense<0.000000e+00> : vector<16x16xf32>
    %3 = tpu.matmul %2, %1, %cst {dimension_numbers = #tpu.dot_dimension_numbers<[1], [0], [0], [1], [0, 0, 1, 1], [], []>} : vector<16x16xf32>, vector<16x16xf32>, vector<16x16xf32> -> vector<16x16xf32>
    %4 = arith.subf %3, %1 : vector<16x16xf32>
    %c0_5 = arith.constant 0 : index
    %c0_6 = arith.constant 0 : index
    %5 = vector.load %arg3[%c0_5, %c0_6] : memref<96x64xf32, #tpu.memory_space<vmem>>, vector<32x64xf32>
    %c32 = arith.constant 32 : index
    %c0_7 = arith.constant 0 : index
    %6 = vector.load %arg3[%c32, %c0_7] : memref<96x64xf32, #tpu.memory_space<vmem>>, vector<64x16xf32>
    %c0_8 = arith.constant 0 : index
    %c0_9 = arith.constant 0 : index
    %7 = vector.load %arg4[%c0_8, %c0_9] : memref<2x64xf32, #tpu.memory_space<vmem>>, vector<1x64xf32>
    %c1 = arith.constant 1 : index
    %c0_10 = arith.constant 0 : index
    %8 = vector.load %arg4[%c1, %c0_10] : memref<2x64xf32, #tpu.memory_space<vmem>>, vector<1x16xf32>
    %cst_11 = arith.constant dense<0.000000e+00> : vector<8x64xf32>
    %9 = tpu.matmul %0, %5, %cst_11 {dimension_numbers = #tpu.dot_dimension_numbers<[1], [0], [0], [1], [0, 0, 1, 1], [], []>} : vector<8x32xf32>, vector<32x64xf32>, vector<8x64xf32> -> vector<8x64xf32>
    %10 = vector.broadcast %7 : vector<1x64xf32> to vector<8x64xf32>
    %11 = arith.addf %9, %10 : vector<8x64xf32>
    %cst_12 = arith.constant 0.000000e+00 : f32
    %12 = vector.broadcast %cst_12 : f32 to vector<8x64xf32>
    %13 = arith.maximumf %11, %12 : vector<8x64xf32>
    %cst_13 = arith.constant dense<0.000000e+00> : vector<8x16xf32>
    %14 = tpu.matmul %13, %6, %cst_13 {dimension_numbers = #tpu.dot_dimension_numbers<[1], [0], [0], [1], [0, 0, 1, 1], [], []>} : vector<8x64xf32>, vector<64x16xf32>, vector<8x16xf32> -> vector<8x16xf32>
    %15 = vector.broadcast %8 : vector<1x16xf32> to vector<8x16xf32>
    %16 = arith.addf %14, %15 : vector<8x16xf32>
    %17 = arith.negf %16 : vector<8x16xf32>
    %18 = math.exp %17 : vector<8x16xf32>
    %cst_14 = arith.constant 1.000000e+00 : f32
    %19 = vector.broadcast %cst_14 : f32 to vector<8x16xf32>
    %20 = arith.addf %19, %18 : vector<8x16xf32>
    %21 = arith.divf %19, %20 : vector<8x16xf32>
    %22 = vector.extract_strided_slice %4 {offsets = [0, 0], sizes = [8, 16], strides = [1, 1]} : vector<16x16xf32> to vector<8x16xf32>
    %23 = arith.mulf %21, %22 : vector<8x16xf32>
    %24 = vector.extract_strided_slice %4 {offsets = [8, 0], sizes = [8, 16], strides = [1, 1]} : vector<16x16xf32> to vector<8x16xf32>
    %25 = arith.mulf %21, %24 : vector<8x16xf32>
    %26 = tpu.concatenate %23, %25 in 1 : vector<8x16xf32>, vector<8x16xf32> -> vector<8x32xf32>
    %c0_15 = arith.constant 0 : index
    %c0_16 = arith.constant 0 : index
    %27 = vector.load %arg5[%c0_15, %c0_16] : memref<8x32xf32, #tpu.memory_space<vmem>>, vector<8x32xf32>
    tpu.vector_store %arg5[%c0_15, %c0_16], %26 {strides = array<i32>} : memref<8x32xf32, #tpu.memory_space<vmem>>, vector<8x32xf32>,
    return
  }
}

</mosaic_0001>

<llo_original>
// kernel: tpu_custom_call.1
$region0: #{tpu_custom_call.1}
  #allocation0 [shape = 'u32[]', space=smem, size = 0x4, offset = 0x4, fixed_abs, tag = 'smem constant byte address 0x4 - core index']
  #allocation1 [shape = 'u32[144,128]{1,0:T(1,128)}', space=vmem, size = 0x12000, scoped, tag = 'internal scratch']
  %s0 = inlined_call_operand.vmem [shape: f32[8,32], index: 0, kind: input, shape index: {}]
  %s1 = inlined_call_operand.vmem [shape: f32[16,16], index: 1, kind: input, shape index: {}]
  %s2 = inlined_call_operand.vmem [shape: f32[16,16], index: 2, kind: input, shape index: {}]
  %s3 = inlined_call_operand.vmem [shape: f32[96,64], index: 3, kind: input, shape index: {}]
  %s4 = inlined_call_operand.vmem [shape: f32[2,64], index: 4, kind: input, shape index: {}]
  %s5 = inlined_call_operand.hbm [shape: f32[8,32], index: 5, kind: output, shape index: {}]
  %s6 = sld [smem:[#allocation0]]
  $region30: #{tpu_custom_call.1} parent=0
    _
  %s8 = ssub.s32 1, %s6
  %s9 = scalar_select 0, %s8, %s6
  $region1: #{tpu_custom_call.1} parent=0
    #allocation2 [shape = 'u8[4096]{0}', space=vmem, size = 0x1000, scoped, tag = 'output window, operand 0, single buffered']
    #allocation3 [shape = 's32[1]{0}', space=sflag, size = 0x4, scoped, tag = 'scoped memory for tpu_custom_call.1']
    %10 = vsyncpa [#allocation3], 0
    // Predicated region
    $region2: #{tpu_custom_call.1} parent=1 // pred_check
      _
    $region3: #{tpu_custom_call.1} parent=1 // pred_check_branch
      %12 = sbr.rel (0) target = $region5
    $region4: #{tpu_custom_call.1} parent=1 // pred_region
      _
    $region5: #{tpu_custom_call.1} parent=1 // pred_fallthru
      _
    // Predicated region
    $region6: #{tpu_custom_call.1} parent=1 // pred_check
      _
    $region7: #{tpu_custom_call.1} parent=1 // pred_check_branch
      %14 = sbr.rel (0) target = $region9
    $region8: #{tpu_custom_call.1} parent=1 // pred_region
      _
    $region9: #{tpu_custom_call.1} parent=1 // pred_fallthru
      _
    // Predicated region
    $region10: #{tpu_custom_call.1} parent=1 // pred_check
      _
    $region11: #{tpu_custom_call.1} parent=1 // pred_check_branch
      %16 = sbr.rel (0) target = $region13
    $region12: #{tpu_custom_call.1} parent=1 // pred_region
      _
    $region13: #{tpu_custom_call.1} parent=1 // pred_fallthru
      _
    // Predicated region
    $region14: #{tpu_custom_call.1} parent=1 // pred_check
      _
    $region15: #{tpu_custom_call.1} parent=1 // pred_check_branch
      %18 = sbr.rel (0) target = $region17
    $region16: #{tpu_custom_call.1} parent=1 // pred_region
      _
    $region17: #{tpu_custom_call.1} parent=1 // pred_fallthru
      _
    // Predicated region
    $region18: #{tpu_custom_call.1} parent=1 // pred_check
      _
    $region19: #{tpu_custom_call.1} parent=1 // pred_check_branch
      %20 = sbr.rel (0) target = $region21
    $region20: #{tpu_custom_call.1} parent=1 // pred_region
      _
    $region21: #{tpu_custom_call.1} parent=1 // pred_fallthru
      _
    %v21 = vld [vmem:[%s0] sm:$0xff]
    %v22 = vld [vmem:[%s1] sm:$0xff]
    %v23 = vld [vmem:[%s1 + $0x8] sm:$0xff]
    %v24 = vld [vmem:[%s2] sm:$0xff]
    %v25 = vld [vmem:[%s2 + $0x8] sm:$0xff]
    %vm26 = vcmask 130048
    %v28 = vsel %vm26, %v24, 0
    %v31 = vsel %vm26, %v25, 0
    %33 = vmatprep.subr.mxu0 0.0
    %34 = vmatpush1.msra.mxu0 %v22
    %35 = vmatprep.subr.mxu0 0.0
    %36 = vmatpush1.msra.mxu0 %v23
    %37 = vmatprep.subr.mxu0 0.0
    %38 = vmatpush1.msra.mxu0 0.0
    %39 = vmatprep.subr.mxu0 0.0
    %40 = vmatpush1.msra.mxu0 0.0
    %41 = vmatprep.subr.mxu0 0.0
    %42 = vmatpush1.msra.mxu0 0.0
    %43 = vmatprep.subr.mxu0 0.0
    %44 = vmatpush1.msra.mxu0 0.0
    %45 = vmatprep.subr.mxu0 0.0
    %46 = vmatpush1.msra.mxu0 0.0
    %47 = vmatprep.subr.mxu0 0.0
    %48 = vmatpush1.msra.mxu0 0.0
    %49 = vmatprep.subr.mxu0 0.0
    %50 = vmatpush1.msra.mxu0 0.0
    %51 = vmatprep.subr.mxu0 0.0
    %52 = vmatpush1.msra.mxu0 0.0
    %53 = vmatprep.subr.mxu0 0.0
    %54 = vmatpush1.msra.mxu0 0.0
    %55 = vmatprep.subr.mxu0 0.0
    %56 = vmatpush1.msra.mxu0 0.0
    %57 = vmatprep.subr.mxu0 0.0
    %58 = vmatpush1.msra.mxu0 0.0
    %59 = vmatprep.subr.mxu0 0.0
    %60 = vmatpush1.msra.mxu0 0.0
    %61 = vmatprep.subr.mxu0 0.0
    %62 = vmatpush1.msra.mxu0 0.0
    %63 = vmatprep.subr.mxu0 0.0
    %64 = vmatpush1.msra.mxu0 0.0
    %65 = vmatprep.subr.mxu0 0.0
    %66 = vmatpush1.msra.mxu0 0.0
    %67 = vmatprep.subr.mxu0 0.0
    %68 = vmatpush1.msra.mxu0 0.0
    %69 = vmatprep.subr.mxu0 0.0
    %70 = vmatpush1.msra.mxu0 0.0
    %71 = vmatprep.subr.mxu0 0.0
    %72 = vmatpush1.msra.mxu0 0.0
    %73 = vmatprep.subr.mxu0 0.0
    %74 = vmatpush1.msra.mxu0 0.0
    %75 = vmatprep.subr.mxu0 0.0
    %76 = vmatpush1.msra.mxu0 0.0
    %77 = vmatprep.subr.mxu0 0.0
    %78 = vmatpush1.msra.mxu0 0.0
    %79 = vmatprep.subr.mxu0 0.0
    %80 = vmatpush1.msra.mxu0 0.0
    %81 = vmatprep.subr.mxu0 0.0
    %82 = vmatpush1.msra.mxu0 0.0
    %83 = vmatprep.subr.mxu0 0.0
    %84 = vmatpush1.msra.mxu0 0.0
    %85 = vmatprep.subr.mxu0 0.0
    %86 = vmatpush1.msra.mxu0 0.0
    %87 = vmatprep.subr.mxu0 0.0
    %88 = vmatpush1.msra.mxu0 0.0
    %89 = vmatprep.subr.mxu0 0.0
    %90 = vmatpush1.msra.mxu0 0.0
    %91 = vmatprep.subr.mxu0 0.0
    %92 = vmatpush1.msra.mxu0 0.0
    %93 = vmatprep.subr.mxu0 0.0
    %94 = vmatpush1.msra.mxu0 0.0
    %95 = vmatprep.subr.mxu0 0.0
    %96 = vmatpush1.msra.mxu0 0.0
    %97 = vmatprep.mubr.f32.mxu0 0.0
    %98 = vmatmul.mubr.f32.gmra.mrb[0].mxu0 %v28
    %v99 = vpop.f32.mrb[0].mxu0
    %v100 = vadd.f32 0.0, %v99
    %v101 = vpop.f32.mrb[0].mxu0
    %102 = vmatprep.mubr.f32.mxu0 0.0
    %103 = vmatmul.mubr.f32.gmra.mrb[0].mxu0 %v31
    %v104 = vpop.f32.mrb[0].mxu0
    %v105 = vadd.f32 0.0, %v104
    %v106 = vpop.f32.mrb[0].mxu0
    %107 = vdwg.mxu0
    %v108 = vsub.f32 %v100, %v22
    %v109 = vsub.f32 %v105, %v23
    %v110 = vld [vmem:[%s3] sm:$0xff]
    %v111 = vld [vmem:[%s3 + $0x8] sm:$0xff]
    %v112 = vld [vmem:[%s3 + $0x10] sm:$0xff]
    %v113 = vld [vmem:[%s3 + $0x18] sm:$0xff]
    %v114 = vld [vmem:[%s3 + $0x20] sm:$0xff]
    %v115 = vld [vmem:[%s3 + $0x28] sm:$0xff]
    %v116 = vld [vmem:[%s3 + $0x30] sm:$0xff]
    %v117 = vld [vmem:[%s3 + $0x38] sm:$0xff]
    %v118 = vld [vmem:[%s3 + $0x40] sm:$0xff]
    %v119 = vld [vmem:[%s3 + $0x48] sm:$0xff]
    %v120 = vld [vmem:[%s3 + $0x50] sm:$0xff]
    %v121 = vld [vmem:[%s3 + $0x58] sm:$0xff]
    %v122 = vld [vmem:[%s4] sm:$0x1]
    %v123 = vld [vmem:[%s4 + $0x1] sm:$0x1]
    %v124 = vlaneseq
    %v125 = vshrl.u32 %v124, 7
    %v126 = vsub.s32 0, %v125
    %v127 = vrot.slane %v122, %v126
    %vm128 = vcmask 261120
    %v130 = vsel %vm128, %v21, 0
    %132 = vmatprep.subr.mxu0 0.0
    %133 = vmatpush1.msra.mxu0 %v110
    %134 = vmatprep.subr.mxu0 0.0
    %135 = vmatpush1.msra.mxu0 %v111
    %136 = vmatprep.subr.mxu0 0.0
    %137 = vmatpush1.msra.mxu0 %v112
    %138 = vmatprep.subr.mxu0 0.0
    %139 = vmatpush1.msra.mxu0 %v113
    %140 = vmatprep.subr.mxu0 0.0
    %141 = vmatpush1.msra.mxu0 0.0
    %142 = vmatprep.subr.mxu0 0.0
    %143 = vmatpush1.msra.mxu0 0.0
    %144 = vmatprep.subr.mxu0 0.0
    %145 = vmatpush1.msra.mxu0 0.0
    %146 = vmatprep.subr.mxu0 0.0
    %147 = vmatpush1.msra.mxu0 0.0
    %148 = vmatprep.subr.mxu0 0.0
    %149 = vmatpush1.msra.mxu0 0.0
    %150 = vmatprep.subr.mxu0 0.0
    %151 = vmatpush1.msra.mxu0 0.0
    %152 = vmatprep.subr.mxu0 0.0
    %153 = vmatpush1.msra.mxu0 0.0
    %154 = vmatprep.subr.mxu0 0.0
    %155 = vmatpush1.msra.mxu0 0.0
    %156 = vmatprep.subr.mxu0 0.0
    %157 = vmatpush1.msra.mxu0 0.0
    %158 = vmatprep.subr.mxu0 0.0
    %159 = vmatpush1.msra.mxu0 0.0
    %160 = vmatprep.subr.mxu0 0.0
    %161 = vmatpush1.msra.mxu0 0.0
    %162 = vmatprep.subr.mxu0 0.0
    %163 = vmatpush1.msra.mxu0 0.0
    %164 = vmatprep.subr.mxu0 0.0
    %165 = vmatpush1.msra.mxu0 0.0
    %166 = vmatprep.subr.mxu0 0.0
    %167 = vmatpush1.msra.mxu0 0.0
    %168 = vmatprep.subr.mxu0 0.0
    %169 = vmatpush1.msra.mxu0 0.0
    %170 = vmatprep.subr.mxu0 0.0
    %171 = vmatpush1.msra.mxu0 0.0
    %172 = vmatprep.subr.mxu0 0.0
    %173 = vmatpush1.msra.mxu0 0.0
    %174 = vmatprep.subr.mxu0 0.0
    %175 = vmatpush1.msra.mxu0 0.0
    %176 = vmatprep.subr.mxu0 0.0
    %177 = vmatpush1.msra.mxu0 0.0
    %178 = vmatprep.subr.mxu0 0.0
    %179 = vmatpush1.msra.mxu0 0.0
    %180 = vmatprep.subr.mxu0 0.0
    %181 = vmatpush1.msra.mxu0 0.0
    %182 = vmatprep.subr.mxu0 0.0
    %183 = vmatpush1.msra.mxu0 0.0
    %184 = vmatprep.subr.mxu0 0.0
    %185 = vmatpush1.msra.mxu0 0.0
    %186 = vmatprep.subr.mxu0 0.0
    %187 = vmatpush1.msra.mxu0 0.0
    %188 = vmatprep.subr.mxu0 0.0
    %189 = vmatpush1.msra.mxu0 0.0
    %190 = vmatprep.subr.mxu0 0.0
    %191 = vmatpush1.msra.mxu0 0.0
    %192 = vmatprep.subr.mxu0 0.0
    %193 = vmatpush1.msra.mxu0 0.0
    %194 = vmatprep.subr.mxu0 0.0
    %195 = vmatpush1.msra.mxu0 0.0
    %196 = vmatprep.mubr.f32.mxu0 0.0
    %197 = vmatmul.mubr.f32.gmra.mrb[0].mxu0 %v130
    %v198 = vpop.f32.mrb[0].mxu0
    %v199 = vadd.f32 %v127, %v198
    %v200 = vpop.f32.mrb[0].mxu0
    %201 = vdwg.mxu0
    %v202 = vmax.f32 %v199, 0.0
    %v203 = vlaneseq
    %v204 = vshrl.u32 %v203, 7
    %v205 = vsub.s32 0, %v204
    %v206 = vrot.slane %v123, %v205
    %vm207 = vcmask 523264
    %v209 = vsel %vm207, %v202, 0
    %211 = vmatprep.subr.mxu0 0.0
    %212 = vmatpush1.msra.mxu0 %v114
    %213 = vmatprep.subr.mxu0 0.0
    %214 = vmatpush1.msra.mxu0 %v115
    %215 = vmatprep.subr.mxu0 0.0
    %216 = vmatpush1.msra.mxu0 %v116
    %217 = vmatprep.subr.mxu0 0.0
    %218 = vmatpush1.msra.mxu0 %v117
    %219 = vmatprep.subr.mxu0 0.0
    %220 = vmatpush1.msra.mxu0 %v118
    %221 = vmatprep.subr.mxu0 0.0
    %222 = vmatpush1.msra.mxu0 %v119
    %223 = vmatprep.subr.mxu0 0.0
    %224 = vmatpush1.msra.mxu0 %v120
    %225 = vmatprep.subr.mxu0 0.0
    %226 = vmatpush1.msra.mxu0 %v121
    %227 = vmatprep.subr.mxu0 0.0
    %228 = vmatpush1.msra.mxu0 0.0
    %229 = vmatprep.subr.mxu0 0.0
    %230 = vmatpush1.msra.mxu0 0.0
    %231 = vmatprep.subr.mxu0 0.0
    %232 = vmatpush1.msra.mxu0 0.0
    %233 = vmatprep.subr.mxu0 0.0
    %234 = vmatpush1.msra.mxu0 0.0
    %235 = vmatprep.subr.mxu0 0.0
    %236 = vmatpush1.msra.mxu0 0.0
    %237 = vmatprep.subr.mxu0 0.0
    %238 = vmatpush1.msra.mxu0 0.0
    %239 = vmatprep.subr.mxu0 0.0
    %240 = vmatpush1.msra.mxu0 0.0
    %241 = vmatprep.subr.mxu0 0.0
    %242 = vmatpush1.msra.mxu0 0.0
    %243 = vmatprep.subr.mxu0 0.0
    %244 = vmatpush1.msra.mxu0 0.0
    %245 = vmatprep.subr.mxu0 0.0
    %246 = vmatpush1.msra.mxu0 0.0
    %247 = vmatprep.subr.mxu0 0.0
    %248 = vmatpush1.msra.mxu0 0.0
    %249 = vmatprep.subr.mxu0 0.0
    %250 = vmatpush1.msra.mxu0 0.0
    %251 = vmatprep.subr.mxu0 0.0
    %252 = vmatpush1.msra.mxu0 0.0
    %253 = vmatprep.subr.mxu0 0.0
    %254 = vmatpush1.msra.mxu0 0.0
    %255 = vmatprep.subr.mxu0 0.0
    %256 = vmatpush1.msra.mxu0 0.0
    %257 = vmatprep.subr.mxu0 0.0
    %258 = vmatpush1.msra.mxu0 0.0
    %259 = vmatprep.subr.mxu0 0.0
    %260 = vmatpush1.msra.mxu0 0.0
    %261 = vmatprep.subr.mxu0 0.0
    %262 = vmatpush1.msra.mxu0 0.0
    %263 = vmatprep.subr.mxu0 0.0
    %264 = vmatpush1.msra.mxu0 0.0
    %265 = vmatprep.subr.mxu0 0.0
    %266 = vmatpush1.msra.mxu0 0.0
    %267 = vmatprep.subr.mxu0 0.0
    %268 = vmatpush1.msra.mxu0 0.0
    %269 = vmatprep.subr.mxu0 0.0
    %270 = vmatpush1.msra.mxu0 0.0
    %271 = vmatprep.subr.mxu0 0.0
    %272 = vmatpush1.msra.mxu0 0.0
    %273 = vmatprep.subr.mxu0 0.0
    %274 = vmatpush1.msra.mxu0 0.0
    %275 = vmatprep.mubr.f32.mxu0 0.0
    %276 = vmatmul.mubr.f32.gmra.mrb[0].mxu0 %v209
    %v277 = vpop.f32.mrb[0].mxu0
    %v278 = vadd.f32 %v206, %v277
    %v279 = vpop.f32.mrb[0].mxu0
    %280 = vdwg.mxu0
    %v281 = vxor.u32 %v278, 2147483648
    %v282 = vmul.f32 %v281, 1.442695
    %v283 = vpow.pop %v282
    %v284 = vadd.f32 %v283, 1.0
    %v285 = vrcp.pop %v284
    %v286 = vmul.f32 1.0, %v285
    %v287 = vmul.f32 %v286, %v108
    %v288 = vmul.f32 %v286, %v109
    %290 = vrot.lane.b32.xlu0 %v288, 16
    %v291 = vpop.permute.xlu0 %290
    %v293 = vsel %vm26, %v287, %v291
    %294 = vst.msk [vmem:[#allocation2] sm:$0xff] %vm128, %v293
    // Predicated region
    $region22: #{tpu_custom_call.1} parent=1 // pred_check
      _
    $region23: #{tpu_custom_call.1} parent=1 // pred_check_branch
      %296 = sbr.rel (0) target = $region25
    $region24: #{tpu_custom_call.1} parent=1 // pred_region
      %s298 = ssub.s32 128, 128
      %299 = vsyncadd [#allocation3], %s298
      %s301 = sshll.u32 [#allocation2], 4
      %s302 = int_to_ptr.vmem [resolvable:$true] %s301
      %304 = dma.vmem_to_hbm [thread:$0]  %s302, 128, %s5, [#allocation3]
    $region25: #{tpu_custom_call.1} parent=1 // pred_fallthru
      _
    // Predicated region
    $region26: #{tpu_custom_call.1} parent=1 // pred_check
      _
    $region27: #{tpu_custom_call.1} parent=1 // pred_check_branch
      %306 = sbr.rel (0) target = $region29
    $region28: #{tpu_custom_call.1} parent=1 // pred_region
      %307 = dma.done [#allocation3], 128
    $region29: #{tpu_custom_call.1} parent=1 // pred_fallthru
      _
    %308 = vsyncpa [#allocation3], 1

</llo_original>
